<compile_context>
chip_gen: v7x
topology: tpu7x:2x2x1
jax: 0.10.0
libtpu: 0.0.40
codegen_flags: <defaults>
</compile_context>

<pallas_src>
import jax
import jax.numpy as jnp
from jax.experimental import pallas as pl
from jax.experimental.pallas import tpu as pltpu


def _make_mlp_kernel(inv_width: float):
    def mlp_kernel(x_ref, w1_ref, b1_ref, w2_ref, o_ref):
        # x:  (1, TB)   batch on lanes
        # w1: (N, 1)    hidden_layer.weight (column layout, as stored)
        # b1: (N, 1)    hidden_layer.bias
        # w2: (N, 1)    output_layer.weight (column layout)
        x = x_ref[...]
        w1 = w1_ref[...]
        b1 = b1_ref[...]
        w2 = w2_ref[...]

        # Rank-1 "matmul" as a VPU broadcast outer product: (N,1)*(1,TB)+(N,1)
        pre = w1 * x + b1                                   # (N, TB)

        # sigmoid(z) = 0.5 * (tanh(z/2) + 1)  -> tanh goes to the EUP slot
        hidden = 0.5 * (jnp.tanh(0.5 * pre) + 1.0)          # (N, TB)

        # Second "matmul" as VPU multiply + cross-sublane (XLU) reduction.
        weighted = hidden * w2                              # (N, TB)
        out = jnp.sum(weighted, axis=0, keepdims=True)      # (1, TB) lane-dense

        o_ref[...] = (out * inv_width).astype(o_ref.dtype)

    return mlp_kernel


def nnm_forward(x, w1, b1, w2, width: int, tile_b: int = 512):
    """Pallas forward pass matching the PyTorch nnm module.

    Args:
      x:  (B, 1) float32
      w1: (N, 1) float32   -- hidden_layer.weight
      b1: (N,)   float32   -- hidden_layer.bias
      w2: (1, N) float32   -- output_layer.weight (no bias)
    Returns:
      (B, 1) float32
    """
    B = x.shape[0]
    N = width

    # Degenerate-dim reshapes only (no transposes).
    x_row = x.reshape(1, B)        # batch on the lane axis
    w1_col = w1.reshape(N, 1)
    b1_col = b1.reshape(N, 1)
    w2_col = w2.reshape(N, 1)

    # Batch tile: multiple of 128 (lane width), capped at tile_b.
    lane = 128
    tb = min(tile_b, ((B + lane - 1) // lane) * lane)
    tb = max(lane, (tb // lane) * lane)
    b_pad = ((B + tb - 1) // tb) * tb
    if b_pad != B:
        x_row = jnp.pad(x_row, ((0, 0), (0, b_pad - B)))

    kernel = _make_mlp_kernel(1.0 / float(width))

    out_row = pl.pallas_call(
        kernel,
        out_shape=jax.ShapeDtypeStruct((1, b_pad), jnp.float32),
        grid=(b_pad // tb,),
        in_specs=[
            pl.BlockSpec((1, tb), lambda i: (0, i)),     # x, tiled over batch
            pl.BlockSpec((N, 1), lambda i: (0, 0)),      # w1, resident
            pl.BlockSpec((N, 1), lambda i: (0, 0)),      # b1, resident
            pl.BlockSpec((N, 1), lambda i: (0, 0)),      # w2, resident
        ],
        out_specs=pl.BlockSpec((1, tb), lambda i: (0, i)),
        compiler_params=pltpu.CompilerParams(
            dimension_semantics=("parallel",)),
    )(x_row, w1_col, b1_col, w2_col)

    return out_row[:, :B].reshape(B, 1)


if __name__ == "__main__":
    B = 8        # batch
    N = 32       # hidden width (module's N)
    DIM = 1      # input dim, fixed by the module

    key = jax.random.PRNGKey(0)
    kx, kw1, kb1, kw2 = jax.random.split(key, 4)

    # Deterministic synthetic parameters (shapes match nn.Linear weights).
    x = jax.random.normal(kx, (B, DIM), dtype=jnp.float32)
    w1 = jax.random.normal(kw1, (N, DIM), dtype=jnp.float32) * 0.5   # hidden_layer.weight
    b1 = jax.random.normal(kb1, (N,), dtype=jnp.float32) * 0.1       # hidden_layer.bias
    w2 = jax.random.normal(kw2, (1, N), dtype=jnp.float32) * 0.5     # output_layer.weight

    out = nnm_forward(x, w1, b1, w2, width=N)
    out = jax.block_until_ready(out)

    # Pure-JAX reference check of the same math.
    ref = (jax.nn.sigmoid(x @ w1.T + b1) @ w2.T) / N
    assert out.shape == (B, 1)
    assert jnp.allclose(out, ref, atol=1e-5, rtol=1e-5), "mismatch vs reference"

    print("KERNEL_OK")
</pallas_src>

<mosaic_0001>
module attributes {stable_mosaic.version = 11 : i64} {
  func.func @mlp_kernel(%arg0: i32, %arg1: memref<1x128xf32, #tpu.memory_space<vmem>>, %arg2: memref<32x1xf32, #tpu.memory_space<vmem>>, %arg3: memref<32x1xf32, #tpu.memory_space<vmem>>, %arg4: memref<32x1xf32, #tpu.memory_space<vmem>>, %arg5: memref<1x128xf32, #tpu.memory_space<vmem>>) attributes {dimension_semantics = [#tpu.dimension_semantics<parallel>], iteration_bounds = array<i64: 1>, scalar_prefetch = 0 : i64, scratch_operands = 0 : i64, tpu.core_type = #tpu.core_type<tc>, window_params = [{transform_indices = @transform_0, window_bounds = array<i64: 1, 128>}, {pipeline_mode = #tpu.pipeline_mode<synchronous>, transform_indices = @transform_1, window_bounds = array<i64: 32, 1>}, {pipeline_mode = #tpu.pipeline_mode<synchronous>, transform_indices = @transform_2, window_bounds = array<i64: 32, 1>}, {pipeline_mode = #tpu.pipeline_mode<synchronous>, transform_indices = @transform_3, window_bounds = array<i64: 32, 1>}, {transform_indices = @transform_4, window_bounds = array<i64: 1, 128>}]} {
    %c0 = arith.constant 0 : index
    %c0_0 = arith.constant 0 : index
    %0 = vector.load %arg1[%c0, %c0_0] : memref<1x128xf32, #tpu.memory_space<vmem>>, vector<1x128xf32>
    %c0_1 = arith.constant 0 : index
    %c0_2 = arith.constant 0 : index
    %1 = vector.load %arg2[%c0_1, %c0_2] : memref<32x1xf32, #tpu.memory_space<vmem>>, vector<32x1xf32>
    %c0_3 = arith.constant 0 : index
    %c0_4 = arith.constant 0 : index
    %2 = vector.load %arg3[%c0_3, %c0_4] : memref<32x1xf32, #tpu.memory_space<vmem>>, vector<32x1xf32>
    %c0_5 = arith.constant 0 : index
    %c0_6 = arith.constant 0 : index
    %3 = vector.load %arg4[%c0_5, %c0_6] : memref<32x1xf32, #tpu.memory_space<vmem>>, vector<32x1xf32>
    %4 = vector.broadcast %1 : vector<32x1xf32> to vector<32x128xf32>
    %5 = vector.broadcast %0 : vector<1x128xf32> to vector<32x128xf32>
    %6 = arith.mulf %4, %5 : vector<32x128xf32>
    %7 = vector.broadcast %2 : vector<32x1xf32> to vector<32x128xf32>
    %8 = arith.addf %6, %7 : vector<32x128xf32>
    %cst = arith.constant 5.000000e-01 : f32
    %9 = vector.broadcast %cst : f32 to vector<32x128xf32>
    %10 = arith.mulf %9, %8 : vector<32x128xf32>
    %11 = math.tanh %10 : vector<32x128xf32>
    %cst_7 = arith.constant 1.000000e+00 : f32
    %12 = vector.broadcast %cst_7 : f32 to vector<32x128xf32>
    %13 = arith.addf %11, %12 : vector<32x128xf32>
    %cst_8 = arith.constant 5.000000e-01 : f32
    %14 = vector.broadcast %cst_8 : f32 to vector<32x128xf32>
    %15 = arith.mulf %14, %13 : vector<32x128xf32>
    %16 = vector.broadcast %3 : vector<32x1xf32> to vector<32x128xf32>
    %17 = arith.mulf %15, %16 : vector<32x128xf32>
    %cst_9 = arith.constant dense<0.000000e+00> : vector<128xf32>
    %18 = vector.multi_reduction <add>, %17, %cst_9 [0] : vector<32x128xf32> to vector<128xf32>
    %19 = vector.shape_cast %18 : vector<128xf32> to vector<1x128xf32>
    %cst_10 = arith.constant 3.125000e-02 : f32
    %20 = vector.broadcast %cst_10 : f32 to vector<1x128xf32>
    %21 = arith.mulf %19, %20 : vector<1x128xf32>
    %c0_11 = arith.constant 0 : index
    %c0_12 = arith.constant 0 : index
    %22 = vector.load %arg5[%c0_11, %c0_12] : memref<1x128xf32, #tpu.memory_space<vmem>>, vector<1x128xf32>
    tpu.vector_store %arg5[%c0_11, %c0_12], %21 {strides = array<i32>} : memref<1x128xf32, #tpu.memory_space<vmem>>, vector<1x128xf32>,
    return
  }
  func.func @transform_0(%arg0: i32) -> (i32, i32) {
    %c0_i32 = arith.constant 0 : i32
    %c0_i32_0 = arith.constant 0 : i32
    return %c0_i32, %arg0 : i32, i32
  }
  func.func @transform_1(%arg0: i32) -> (i32, i32) {
    %c0_i32 = arith.constant 0 : i32
    %c0_i32_0 = arith.constant 0 : i32
    %c0_i32_1 = arith.constant 0 : i32
    return %c0_i32, %c0_i32_0 : i32, i32
  }
  func.func @transform_2(%arg0: i32) -> (i32, i32) {
    %c0_i32 = arith.constant 0 : i32
    %c0_i32_0 = arith.constant 0 : i32
    %c0_i32_1 = arith.constant 0 : i32
    return %c0_i32, %c0_i32_0 : i32, i32
  }
  func.func @transform_3(%arg0: i32) -> (i32, i32) {
    %c0_i32 = arith.constant 0 : i32
    %c0_i32_0 = arith.constant 0 : i32
    %c0_i32_1 = arith.constant 0 : i32
    return %c0_i32, %c0_i32_0 : i32, i32
  }
  func.func @transform_4(%arg0: i32) -> (i32, i32) {
    %c0_i32 = arith.constant 0 : i32
    %c0_i32_0 = arith.constant 0 : i32
    return %c0_i32, %arg0 : i32, i32
  }
}

</mosaic_0001>

<llo_original>
// kernel: tpu_custom_call.1
$region0: #{tpu_custom_call.1}
  #allocation0 [shape = 'u32[]', space=smem, size = 0x4, offset = 0x4, fixed_abs, tag = 'smem constant byte address 0x4 - core index']
  #allocation1 [shape = 'u32[144,128]{1,0:T(1,128)}', space=vmem, size = 0x12000, scoped, tag = 'internal scratch']
  %s0 = inlined_call_operand.vmem [shape: f32[1,128], index: 0, kind: input, shape index: {}]
  %s1 = inlined_call_operand.vmem [shape: f32[32,1], index: 1, kind: input, shape index: {}]
  %s2 = inlined_call_operand.vmem [shape: f32[32,1], index: 2, kind: input, shape index: {}]
  %s3 = inlined_call_operand.vmem [shape: f32[32,1], index: 3, kind: input, shape index: {}]
  %s4 = inlined_call_operand.hbm [shape: f32[1,128], index: 4, kind: output, shape index: {}]
  %s5 = sld [smem:[#allocation0]]
  $region26: #{tpu_custom_call.1} parent=0
    _
  %s7 = ssub.s32 1, %s5
  %s8 = scalar_select 0, %s7, %s5
  $region1: #{tpu_custom_call.1} parent=0
    #allocation2 [shape = 'u8[512]{0}', space=vmem, size = 0x400, scoped, tag = 'output window, operand 0, single buffered']
    #allocation3 [shape = 's32[1]{0}', space=sflag, size = 0x4, scoped, tag = 'scoped memory for tpu_custom_call.1']
    %9 = vsyncpa [#allocation3], 0
    // Predicated region
    $region2: #{tpu_custom_call.1} parent=1 // pred_check
      _
    $region3: #{tpu_custom_call.1} parent=1 // pred_check_branch
      %11 = sbr.rel (0) target = $region5
    $region4: #{tpu_custom_call.1} parent=1 // pred_region
      _
    $region5: #{tpu_custom_call.1} parent=1 // pred_fallthru
      _
    // Predicated region
    $region6: #{tpu_custom_call.1} parent=1 // pred_check
      _
    $region7: #{tpu_custom_call.1} parent=1 // pred_check_branch
      %13 = sbr.rel (0) target = $region9
    $region8: #{tpu_custom_call.1} parent=1 // pred_region
      _
    $region9: #{tpu_custom_call.1} parent=1 // pred_fallthru
      _
    // Predicated region
    $region10: #{tpu_custom_call.1} parent=1 // pred_check
      _
    $region11: #{tpu_custom_call.1} parent=1 // pred_check_branch
      %15 = sbr.rel (0) target = $region13
    $region12: #{tpu_custom_call.1} parent=1 // pred_region
      _
    $region13: #{tpu_custom_call.1} parent=1 // pred_fallthru
      _
    // Predicated region
    $region14: #{tpu_custom_call.1} parent=1 // pred_check
      _
    $region15: #{tpu_custom_call.1} parent=1 // pred_check_branch
      %17 = sbr.rel (0) target = $region17
    $region16: #{tpu_custom_call.1} parent=1 // pred_region
      _
    $region17: #{tpu_custom_call.1} parent=1 // pred_fallthru
      _
    %v18 = vld [vmem:[%s0] sm:$0x1]
    %v19 = vld [vmem:[%s1] sm:$0xff]
    %v20 = vld [vmem:[%s1 + $0x8] sm:$0xff]
    %v21 = vld [vmem:[%s1 + $0x10] sm:$0xff]
    %v22 = vld [vmem:[%s1 + $0x18] sm:$0xff]
    %v23 = vld [vmem:[%s2] sm:$0xff]
    %v24 = vld [vmem:[%s2 + $0x8] sm:$0xff]
    %v25 = vld [vmem:[%s2 + $0x10] sm:$0xff]
    %v26 = vld [vmem:[%s2 + $0x18] sm:$0xff]
    %v27 = vld [vmem:[%s3] sm:$0xff]
    %v28 = vld [vmem:[%s3 + $0x8] sm:$0xff]
    %v29 = vld [vmem:[%s3 + $0x10] sm:$0xff]
    %v30 = vld [vmem:[%s3 + $0x18] sm:$0xff]
    %32 = vset.pattern.permute.xlu0 0
    %33 = vperm.xlu0 %32, %v19
    %v34 = vpop.permute.xlu0 %33
    %37 = vset.pattern.permute.xlu0 0
    %38 = vperm.xlu0 %37, %v20
    %v39 = vpop.permute.xlu0 %38
    %42 = vset.pattern.permute.xlu0 0
    %43 = vperm.xlu0 %42, %v21
    %v44 = vpop.permute.xlu0 %43
    %47 = vset.pattern.permute.xlu0 0
    %48 = vperm.xlu0 %47, %v22
    %v49 = vpop.permute.xlu0 %48
    %v52 = vlaneseq
    %v53 = vshrl.u32 %v52, 7
    %v54 = vsub.s32 0, %v53
    %v55 = vrot.slane %v18, %v54
    %v57 = vmul.f32 %v34, %v55
    %v58 = vmul.f32 %v39, %v55
    %v59 = vmul.f32 %v44, %v55
    %v60 = vmul.f32 %v49, %v55
    %62 = vset.pattern.permute.xlu0 0
    %63 = vperm.xlu0 %62, %v23
    %v64 = vpop.permute.xlu0 %63
    %67 = vset.pattern.permute.xlu0 0
    %68 = vperm.xlu0 %67, %v24
    %v69 = vpop.permute.xlu0 %68
    %72 = vset.pattern.permute.xlu0 0
    %73 = vperm.xlu0 %72, %v25
    %v74 = vpop.permute.xlu0 %73
    %77 = vset.pattern.permute.xlu0 0
    %78 = vperm.xlu0 %77, %v26
    %v79 = vpop.permute.xlu0 %78
    %v81 = vadd.f32 %v57, %v64
    %v82 = vadd.f32 %v58, %v69
    %v83 = vadd.f32 %v59, %v74
    %v84 = vadd.f32 %v60, %v79
    %v85 = vmul.f32 %v81, 0.5
    %v86 = vmul.f32 %v82, 0.5
    %v87 = vmul.f32 %v83, 0.5
    %v88 = vmul.f32 %v84, 0.5
    %v89 = vtanh.pop %v85
    %v90 = vtanh.pop %v86
    %v91 = vtanh.pop %v87
    %v92 = vtanh.pop %v88
    %v93 = vadd.f32 %v89, 1.0
    %v94 = vadd.f32 %v90, 1.0
    %v95 = vadd.f32 %v91, 1.0
    %v96 = vadd.f32 %v92, 1.0
    %v97 = vmul.f32 %v93, 0.5
    %v98 = vmul.f32 %v94, 0.5
    %v99 = vmul.f32 %v95, 0.5
    %v100 = vmul.f32 %v96, 0.5
    %102 = vset.pattern.permute.xlu0 0
    %103 = vperm.xlu0 %102, %v27
    %v104 = vpop.permute.xlu0 %103
    %107 = vset.pattern.permute.xlu0 0
    %108 = vperm.xlu0 %107, %v28
    %v109 = vpop.permute.xlu0 %108
    %112 = vset.pattern.permute.xlu0 0
    %113 = vperm.xlu0 %112, %v29
    %v114 = vpop.permute.xlu0 %113
    %117 = vset.pattern.permute.xlu0 0
    %118 = vperm.xlu0 %117, %v30
    %v119 = vpop.permute.xlu0 %118
    %v121 = vmul.f32 %v97, %v104
    %v122 = vmul.f32 %v98, %v109
    %v123 = vmul.f32 %v99, %v114
    %v124 = vmul.f32 %v100, %v119
    %v125 = vadd.f32 %v121, %v122
    %v126 = vadd.f32 %v125, %v123
    %v127 = vadd.f32 %v126, %v124
    %v128 = vrot.slane %v127, 4
    %v129 = vadd.f32 %v127, %v128
    %v130 = vrot.slane %v129, 2
    %v131 = vadd.f32 %v129, %v130
    %v132 = vrot.slane %v131, 1
    %v133 = vadd.f32 %v131, %v132
    %v134 = vmul.f32 %v133, 0.03125
    %135 = vst [vmem:[#allocation2] sm:$0x1] %v134
    // Predicated region
    $region18: #{tpu_custom_call.1} parent=1 // pred_check
      _
    $region19: #{tpu_custom_call.1} parent=1 // pred_check_branch
      %137 = sbr.rel (0) target = $region21
    $region20: #{tpu_custom_call.1} parent=1 // pred_region
      %s139 = ssub.s32 16, 16
      %140 = vsyncadd [#allocation3], %s139
      %s142 = sshll.u32 [#allocation2], 4
      %s143 = int_to_ptr.vmem [resolvable:$true] %s142
      %145 = dma.vmem_to_hbm [thread:$0]  %s143, 16, %s4, [#allocation3]
    $region21: #{tpu_custom_call.1} parent=1 // pred_fallthru
      _
    // Predicated region
    $region22: #{tpu_custom_call.1} parent=1 // pred_check
      _
    $region23: #{tpu_custom_call.1} parent=1 // pred_check_branch
      %147 = sbr.rel (0) target = $region25
    $region24: #{tpu_custom_call.1} parent=1 // pred_region
      %148 = dma.done [#allocation3], 16
    $region25: #{tpu_custom_call.1} parent=1 // pred_fallthru
      _
    %149 = vsyncpa [#allocation3], 1

</llo_original>
